<compile_context>
chip_gen: v7x
topology: tpu7x:2x2x1
jax: 0.10.0
libtpu: 0.0.40
codegen_flags: <defaults>
</compile_context>

<pallas_src>
import functools

import jax
import jax.numpy as jnp
from jax.experimental import pallas as pl
from jax.experimental.pallas import tpu as pltpu


_SUPPORTED_ACTIVATIONS = (None, "relu", "leaky_relu", "sigmoid")


def _round_up(x: int, m: int) -> int:
    return (x + m - 1) // m * m


def _vmem_budget_bytes() -> int:
    """~75% of this generation's physical VMEM; conservative 64 MiB fallback."""
    try:
        cap = int(pltpu.get_tpu_info().vmem_capacity_bytes)
    except Exception:
        cap = 64 * 1024 * 1024
    return cap * 3 // 4


def _pick_tile(dim: int, granule: int, max_tile: int, min_tile: int) -> int:
    """Granule-aligned tile that minimizes padded work; prefers larger tiles on ties."""
    dim_al = _round_up(dim, granule)
    if dim_al <= max_tile:
        return dim_al  # exact fit: one block, zero padding waste
    min_tile = max(min_tile, granule)
    cands = set()
    for c in (max_tile, max_tile // 2, max_tile // 4, min_tile):
        c = _round_up(max(min(c, max_tile), min_tile), granule)
        cands.add(c)
    best_t, best_pad = None, None
    for t in sorted(cands, reverse=True):
        pad = _round_up(dim_al, t)
        if best_pad is None or pad < best_pad:
            best_t, best_pad = t, pad
    return best_t


def _apply_activation(y, activation):
    if activation is None:
        return y
    if activation == "relu":
        return jnp.maximum(y, 0.0)
    if activation == "leaky_relu":
        return jnp.maximum(y, 0.01 * y)  # PyTorch default negative_slope = 0.01
    if activation == "sigmoid":
        return jax.nn.sigmoid(y)  # exp path routes to EUP
    raise ValueError(activation)


def _single_k_kernel(x_ref, w_ref, b_ref, o_ref, *, activation):
    # Whole (padded) K in one shot: no accumulator scratch, no k-phase traffic.
    y = jnp.dot(x_ref[...], w_ref[...], preferred_element_type=jnp.float32)
    y = y + b_ref[...]  # (tm, tn) + (1, tn) broadcast, f32
    o_ref[...] = _apply_activation(y, activation).astype(o_ref.dtype)


def _multi_k_kernel(x_ref, w_ref, b_ref, o_ref, acc_ref, *, activation):
    k = pl.program_id(2)

    @pl.when(k == 0)
    def _():
        # Seed the accumulator with the bias: no zero-fill, no bias add at finalize.
        acc_ref[...] = jnp.broadcast_to(b_ref[...], acc_ref.shape)

    acc_ref[...] += jnp.dot(
        x_ref[...], w_ref[...], preferred_element_type=jnp.float32
    )

    @pl.when(k == pl.num_programs(2) - 1)
    def _():
        o_ref[...] = _apply_activation(acc_ref[...], activation).astype(o_ref.dtype)


def prepare_params(w, b, compute_dtype=jnp.bfloat16):
    """Pre-cast weights once (store bf16) so the per-call wrapper cast is a no-op."""
    return w.astype(compute_dtype), b.astype(jnp.float32)


def linear_block_forward(
    x,
    w,
    b,
    *,
    activation=None,
    compute_dtype=jnp.bfloat16,
    tm=None,
    tn=None,
    tk=None,
):
    """x: (B, IN), w: (IN, OUT), b: (OUT,) -> activation(x @ w + b), shape (B, OUT)."""
    if activation not in _SUPPORTED_ACTIVATIONS:
        raise ValueError(f"unsupported activation: {activation}")

    B, IN = x.shape
    K2, OUT = w.shape
    assert K2 == IN, (K2, IN)
    assert b.shape == (OUT,), b.shape

    in_dtype = jnp.dtype(compute_dtype if compute_dtype is not None else x.dtype)
    out_dtype = jnp.dtype(x.dtype)
    in_bytes = in_dtype.itemsize
    out_bytes = out_dtype.itemsize

    budget = _vmem_budget_bytes()

    # ---- tile selection (padding-aware, dtype-aware sublane granule) ----
    m_granule = max(8, 8 * (4 // in_bytes))  # f32: 8, bf16/f16: 16, 8-bit: 32
    if tm is None:
        tm = _pick_tile(B, m_granule, max_tile=512, min_tile=128)
    else:
        tm = _round_up(min(tm, _round_up(B, m_granule)), m_granule)
    if tn is None:
        tn = _pick_tile(OUT, 128, max_tile=512, min_tile=128)
    else:
        tn = _round_up(min(tn, _round_up(OUT, 128)), 128)

    Mp = _round_up(B, tm)
    Np = _round_up(OUT, tn)
    kp_full = _round_up(IN, 128)

    # Megacore: if the parallel grid is a single block on a big problem, split N so
    # both TensorCores get work (v7x has 2 TCs per chip).
    if (
        tn is not None
        and (Mp // tm) * (Np // tn) == 1
        and 2 * Mp * Np * kp_full >= (1 << 28)
    ):
        for cand in (Np // 2, 256, 128):
            if cand >= 128 and cand % 128 == 0 and Np % cand == 0:
                tn = cand
                break

    # K tile: use the full (padded) K and drop the K grid axis when it fits the
    # VMEM budget; otherwise pick a padding-friendly K tile.
    if tk is not None:
        tk = _round_up(min(tk, kp_full), 128)
    else:
        need_full_k = (
            2 * (tm * kp_full + kp_full * tn) * in_bytes
            + 2 * tm * tn * out_bytes
            + tm * tn * 4
            + 2 * tn * 4
        )
        if need_full_k <= budget // 2:
            tk = kp_full
        else:
            tk = _pick_tile(IN, 128, max_tile=2048, min_tile=512)
    Kp = _round_up(IN, tk)
    num_k = Kp // tk

    # ---- pad + cast (casts are no-ops if the caller pre-stores bf16 params) ----
    xp = x.astype(in_dtype)
    wp = w.astype(in_dtype)
    if (Mp, Kp) != (B, IN):
        xp = jnp.pad(xp, ((0, Mp - B), (0, Kp - IN)))
    if (Kp, Np) != (IN, OUT):
        wp = jnp.pad(wp, ((0, Kp - IN), (0, Np - OUT)))
    bp = b.astype(jnp.float32)
    if Np != OUT:
        bp = jnp.pad(bp, (0, Np - OUT))
    bp = bp.reshape(1, Np)

    # ---- VMEM limit: cover the double-buffered working set, stay inside physical ----
    need = (
        2 * (tm * tk + tk * tn) * in_bytes      # x / w tiles (double-buffered)
        + 2 * tm * tn * out_bytes               # output tile (double-buffered)
        + 2 * tn * 4                            # bias tile
        + (tm * tn * 4 if num_k > 1 else 0)     # f32 accumulator scratch
    )
    vmem_limit = int(min(budget, max(32 * 1024 * 1024, 2 * need)))

    cost = pl.CostEstimate(
        flops=2 * Mp * Np * Kp,
        transcendentals=(Mp * Np if activation == "sigmoid" else 0),
        bytes_accessed=(Mp * Kp + Kp * Np) * in_bytes + Mp * Np * out_bytes + Np * 4,
    )

    if num_k == 1:
        kernel = functools.partial(_single_k_kernel, activation=activation)
        grid = (Mp // tm, Np // tn)
        in_specs = [
            pl.BlockSpec((tm, tk), lambda i, j: (i, 0)),
            pl.BlockSpec((tk, tn), lambda i, j: (0, j)),
            pl.BlockSpec((1, tn), lambda i, j: (0, j)),
        ]
        out_specs = pl.BlockSpec((tm, tn), lambda i, j: (i, j))
        scratch_shapes = []
        dim_sem = ("parallel", "parallel")
    else:
        kernel = functools.partial(_multi_k_kernel, activation=activation)
        grid = (Mp // tm, Np // tn, num_k)
        in_specs = [
            pl.BlockSpec((tm, tk), lambda i, j, k: (i, k)),
            pl.BlockSpec((tk, tn), lambda i, j, k: (k, j)),
            pl.BlockSpec((1, tn), lambda i, j, k: (0, j)),
        ]
        out_specs = pl.BlockSpec((tm, tn), lambda i, j, k: (i, j))
        scratch_shapes = [pltpu.VMEM((tm, tn), jnp.float32)]
        dim_sem = ("parallel", "parallel", "arbitrary")

    out = pl.pallas_call(
        kernel,
        out_shape=jax.ShapeDtypeStruct((Mp, Np), out_dtype),
        grid_spec=pltpu.PrefetchScalarGridSpec(
            num_scalar_prefetch=0,
            grid=grid,
            in_specs=in_specs,
            out_specs=out_specs,
            scratch_shapes=scratch_shapes,
        ),
        compiler_params=pltpu.CompilerParams(
            dimension_semantics=dim_sem,
            vmem_limit_bytes=vmem_limit,
        ),
        cost_estimate=cost,
    )(xp, wp, bp)

    if (Mp, Np) != (B, OUT):
        out = out[:B, :OUT]
    return out


def init_params(key, input_size: int, output_size: int):
    """Kaiming-uniform-style init (relu gain), zero bias — mirrors module.reset()."""
    gain = jnp.sqrt(2.0)  # nonlinearity='relu'
    bound = gain * jnp.sqrt(3.0 / input_size)
    # PyTorch weight is (OUT, IN); we store its transpose (IN, OUT).
    w = jax.random.uniform(
        key, (input_size, output_size), dtype=jnp.float32, minval=-bound, maxval=bound
    )
    b = jnp.zeros((output_size,), dtype=jnp.float32)
    return w, b


# TODO(synk): load_state_dict / save_state_dict / named_parameters are host-side
# torch utilities with no kernel equivalent; only forward() is implemented here.


if __name__ == "__main__":
    # --- test 1: small shapes, relu; bf16 default and strict f32 mode ---
    batch, input_size, output_size = 8, 32, 16
    key = jax.random.PRNGKey(0)
    kx, kw, kb = jax.random.split(key, 3)
    x = jax.random.normal(kx, (batch, input_size), dtype=jnp.float32)
    w, b = init_params(kw, input_size, output_size)
    b = 0.05 * jax.random.normal(kb, (output_size,), dtype=jnp.float32)

    y = jax.block_until_ready(linear_block_forward(x, w, b, activation="relu"))
    y_ref = jnp.maximum(x @ w + b[None, :], 0.0)
    assert y.shape == (batch, output_size)
    assert jnp.allclose(y, y_ref, atol=3e-2, rtol=3e-2)

    y_strict = jax.block_until_ready(
        linear_block_forward(x, w, b, activation="relu", compute_dtype=jnp.float32)
    )
    assert jnp.allclose(y_strict, y_ref, atol=1e-5, rtol=1e-5)

    # --- test 2: non-aligned B/OUT, full-K single-block path, sigmoid ---
    B2, IN2, OUT2 = 272, 1024, 384
    kx2, kw2, kb2 = jax.random.split(jax.random.PRNGKey(1), 3)
    x2 = jax.random.normal(kx2, (B2, IN2), dtype=jnp.float32)
    w2, _ = init_params(kw2, IN2, OUT2)
    b2 = 0.05 * jax.random.normal(kb2, (OUT2,), dtype=jnp.float32)
    w2c, b2c = prepare_params(w2, b2)  # pre-cast weights (per-call cast becomes a no-op)
    y2 = jax.block_until_ready(linear_block_forward(x2, w2c, b2c, activation="sigmoid"))
    y2_ref = jax.nn.sigmoid(x2 @ w2 + b2[None, :])
    assert y2.shape == (B2, OUT2)
    assert jnp.allclose(y2, y2_ref, atol=1e-2, rtol=1e-2)

    # --- test 3: forced K tiling to exercise the multi-K accumulator kernel ---
    B3, IN3, OUT3 = 64, 512, 256
    kx3, kw3, kb3 = jax.random.split(jax.random.PRNGKey(2), 3)
    x3 = jax.random.normal(kx3, (B3, IN3), dtype=jnp.float32)
    w3, _ = init_params(kw3, IN3, OUT3)
    b3 = 0.05 * jax.random.normal(kb3, (OUT3,), dtype=jnp.float32)
    y3 = jax.block_until_ready(
        linear_block_forward(x3, w3, b3, activation="leaky_relu", tk=128)
    )
    z3 = x3 @ w3 + b3[None, :]
    y3_ref = jnp.maximum(z3, 0.01 * z3)
    assert y3.shape == (B3, OUT3)
    assert jnp.allclose(y3, y3_ref, atol=3e-2, rtol=3e-2)

    print("KERNEL_OK")
</pallas_src>

<mosaic_0001>
module attributes {stable_mosaic.version = 11 : i64} {
  func.func @_single_k_kernel(%arg0: i32, %arg1: i32, %arg2: memref<16x128xbf16, #tpu.memory_space<vmem>>, %arg3: memref<128x128xbf16, #tpu.memory_space<vmem>>, %arg4: memref<1x128xf32, #tpu.memory_space<vmem>>, %arg5: memref<16x128xf32, #tpu.memory_space<vmem>>) attributes {dimension_semantics = [#tpu.dimension_semantics<parallel>, #tpu.dimension_semantics<parallel>], iteration_bounds = array<i64: 1, 1>, scalar_prefetch = 0 : i64, scratch_operands = 0 : i64, tpu.core_type = #tpu.core_type<tc>, window_params = [{transform_indices = @transform_0, window_bounds = array<i64: 16, 128>}, {transform_indices = @transform_1, window_bounds = array<i64: 128, 128>}, {transform_indices = @transform_2, window_bounds = array<i64: 1, 128>}, {transform_indices = @transform_3, window_bounds = array<i64: 16, 128>}]} {
    %c0 = arith.constant 0 : index
    %c0_0 = arith.constant 0 : index
    %0 = vector.load %arg2[%c0, %c0_0] : memref<16x128xbf16, #tpu.memory_space<vmem>>, vector<16x128xbf16>
    %c0_1 = arith.constant 0 : index
    %c0_2 = arith.constant 0 : index
    %1 = vector.load %arg3[%c0_1, %c0_2] : memref<128x128xbf16, #tpu.memory_space<vmem>>, vector<128x128xbf16>
    %cst = arith.constant dense<0.000000e+00> : vector<16x128xf32>
    %2 = tpu.matmul %0, %1, %cst {dimension_numbers = #tpu.dot_dimension_numbers<[1], [0], [0], [1], [0, 0, 1, 1], [], []>} : vector<16x128xbf16>, vector<128x128xbf16>, vector<16x128xf32> -> vector<16x128xf32>
    %c0_3 = arith.constant 0 : index
    %c0_4 = arith.constant 0 : index
    %3 = vector.load %arg4[%c0_3, %c0_4] : memref<1x128xf32, #tpu.memory_space<vmem>>, vector<1x128xf32>
    %4 = vector.broadcast %3 : vector<1x128xf32> to vector<16x128xf32>
    %5 = arith.addf %2, %4 : vector<16x128xf32>
    %cst_5 = arith.constant 0.000000e+00 : f32
    %6 = vector.broadcast %cst_5 : f32 to vector<16x128xf32>
    %7 = arith.maximumf %5, %6 : vector<16x128xf32>
    %c0_6 = arith.constant 0 : index
    %c0_7 = arith.constant 0 : index
    %8 = vector.load %arg5[%c0_6, %c0_7] : memref<16x128xf32, #tpu.memory_space<vmem>>, vector<16x128xf32>
    tpu.vector_store %arg5[%c0_6, %c0_7], %7 {strides = array<i32>} : memref<16x128xf32, #tpu.memory_space<vmem>>, vector<16x128xf32>,
    return
  }
  func.func @transform_0(%arg0: i32, %arg1: i32) -> (i32, i32) {
    %c0_i32 = arith.constant 0 : i32
    %c0_i32_0 = arith.constant 0 : i32
    return %arg0, %c0_i32 : i32, i32
  }
  func.func @transform_1(%arg0: i32, %arg1: i32) -> (i32, i32) {
    %c0_i32 = arith.constant 0 : i32
    %c0_i32_0 = arith.constant 0 : i32
    return %c0_i32, %arg1 : i32, i32
  }
  func.func @transform_2(%arg0: i32, %arg1: i32) -> (i32, i32) {
    %c0_i32 = arith.constant 0 : i32
    %c0_i32_0 = arith.constant 0 : i32
    return %c0_i32, %arg1 : i32, i32
  }
  func.func @transform_3(%arg0: i32, %arg1: i32) -> (i32, i32) {
    %c0_i32 = arith.constant 0 : i32
    return %arg0, %arg1 : i32, i32
  }
}

</mosaic_0001>

<llo_original>
// kernel: tpu_custom_call.1
$region0: #{tpu_custom_call.1}
  #allocation0 [shape = 'u32[]', space=smem, size = 0x4, offset = 0x4, fixed_abs, tag = 'smem constant byte address 0x4 - core index']
  #allocation1 [shape = 'u32[144,128]{1,0:T(1,128)}', space=vmem, size = 0x12000, scoped, tag = 'internal scratch']
  %s0 = inlined_call_operand.hbm [shape: bf16[16,128], index: 0, kind: input, shape index: {}]
  %s1 = inlined_call_operand.hbm [shape: bf16[128,128], index: 1, kind: input, shape index: {}]
  %s2 = inlined_call_operand.vmem [shape: f32[1,128], index: 2, kind: input, shape index: {}]
  %s3 = inlined_call_operand.hbm [shape: f32[16,128], index: 3, kind: output, shape index: {}]
  %s4 = sld [smem:[#allocation0]]
  $region30: #{tpu_custom_call.1} parent=0
    _
  %s6 = ssub.s32 1, %s4
  %s7 = scalar_select 0, %s6, %s4
  $region1: #{tpu_custom_call.1} parent=0
    #allocation2 [shape = 'u8[4096]{0}', space=vmem, size = 0x1000, scoped, tag = 'input window, operand 0, single buffered']
    #allocation3 [shape = 's32[1]{0}', space=sflag, size = 0x4, scoped, tag = 'scoped memory for tpu_custom_call.1']
    #allocation4 [shape = 's32[1]{0}', space=sflag, size = 0x4, scoped, tag = 'scoped memory for tpu_custom_call.1']
    #allocation5 [shape = 'u8[32768]{0}', space=vmem, size = 0x8000, scoped, tag = 'input window, operand 1, single buffered']
    #allocation6 [shape = 's32[1]{0}', space=sflag, size = 0x4, scoped, tag = 'scoped memory for tpu_custom_call.1']
    #allocation7 [shape = 'u8[8192]{0}', space=vmem, size = 0x2000, scoped, tag = 'output window, operand 0, single buffered']
    %8 = vsyncpa [#allocation3], 0
    %9 = vsyncpa [#allocation6], 0
    %10 = vsyncpa [#allocation4], 0
    // Predicated region
    $region2: #{tpu_custom_call.1} parent=1 // pred_check
      _
    $region3: #{tpu_custom_call.1} parent=1 // pred_check_branch
      %12 = sbr.rel (0) target = $region5
    $region4: #{tpu_custom_call.1} parent=1 // pred_region
      %s14 = ssub.s32 128, 128
      %15 = vsyncadd [#allocation3], %s14
      %s16 = sshll.u32 [#allocation2], 4
      %s17 = int_to_ptr.vmem [resolvable:$true] %s16
      %22 = dma.hbm_to_vmem [thread:$0]  %s0, 128, %s17, [#allocation3], 64, 64, 4
    $region5: #{tpu_custom_call.1} parent=1 // pred_fallthru
      _
    // Predicated region
    $region6: #{tpu_custom_call.1} parent=1 // pred_check
      _
    $region7: #{tpu_custom_call.1} parent=1 // pred_check_branch
      %24 = sbr.rel (0) target = $region9
    $region8: #{tpu_custom_call.1} parent=1 // pred_region
      %s26 = ssub.s32 1024, 1024
      %27 = vsyncadd [#allocation6], %s26
      %s28 = sshll.u32 [#allocation5], 4
      %s29 = int_to_ptr.vmem [resolvable:$true] %s28
      %34 = dma.hbm_to_vmem [thread:$0]  %s1, 1024, %s29, [#allocation6], 64, 64, 4
    $region9: #{tpu_custom_call.1} parent=1 // pred_fallthru
      _
    // Predicated region
    $region10: #{tpu_custom_call.1} parent=1 // pred_check
      _
    $region11: #{tpu_custom_call.1} parent=1 // pred_check_branch
      %36 = sbr.rel (0) target = $region13
    $region12: #{tpu_custom_call.1} parent=1 // pred_region
      _
    $region13: #{tpu_custom_call.1} parent=1 // pred_fallthru
      _
    // Predicated region
    $region14: #{tpu_custom_call.1} parent=1 // pred_check
      _
    $region15: #{tpu_custom_call.1} parent=1 // pred_check_branch
      %38 = sbr.rel (0) target = $region17
    $region16: #{tpu_custom_call.1} parent=1 // pred_region
      %39 = dma.done [#allocation3], 128
    $region17: #{tpu_custom_call.1} parent=1 // pred_fallthru
      _
    // Predicated region
    $region18: #{tpu_custom_call.1} parent=1 // pred_check
      _
    $region19: #{tpu_custom_call.1} parent=1 // pred_check_branch
      %41 = sbr.rel (0) target = $region21
    $region20: #{tpu_custom_call.1} parent=1 // pred_region
      %42 = dma.done [#allocation6], 1024
    $region21: #{tpu_custom_call.1} parent=1 // pred_fallthru
      _
    %v44 = vld [vmem:[#allocation2] sm:$0xf]
    %v45 = vld [vmem:[#allocation2 + $0x4] sm:$0xf]
    %v46 = vld [vmem:[#allocation5] sm:$0xf]
    %v47 = vld [vmem:[#allocation5 + $0x4] sm:$0xf]
    %v48 = vld [vmem:[#allocation5 + $0x8] sm:$0xf]
    %v49 = vld [vmem:[#allocation5 + $0xc] sm:$0xf]
    %v50 = vld [vmem:[#allocation5 + $0x10] sm:$0xf]
    %v51 = vld [vmem:[#allocation5 + $0x14] sm:$0xf]
    %v52 = vld [vmem:[#allocation5 + $0x18] sm:$0xf]
    %v53 = vld [vmem:[#allocation5 + $0x1c] sm:$0xf]
    %v54 = vld [vmem:[#allocation5 + $0x20] sm:$0xf]
    %v55 = vld [vmem:[#allocation5 + $0x24] sm:$0xf]
    %v56 = vld [vmem:[#allocation5 + $0x28] sm:$0xf]
    %v57 = vld [vmem:[#allocation5 + $0x2c] sm:$0xf]
    %v58 = vld [vmem:[#allocation5 + $0x30] sm:$0xf]
    %v59 = vld [vmem:[#allocation5 + $0x34] sm:$0xf]
    %v60 = vld [vmem:[#allocation5 + $0x38] sm:$0xf]
    %v61 = vld [vmem:[#allocation5 + $0x3c] sm:$0xf]
    %v62 = vld [vmem:[%s2] sm:$0x1]
    %v64 = vlaneseq
    %v65 = vshrl.u32 %v64, 7
    %v66 = vsub.s32 0, %v65
    %v67 = vrot.slane %v62, %v66
    %v71 = vunpack.c.l.b16 %v44
    %v72 = vunpack.c.l.b16 %v45
    %v73 = vpack.c.b16 %v72, %v71
    %v91 = vunpack.c.l.b16 %v46
    %v92 = vunpack.c.l.b16 %v47
    %v93 = vunpack.c.l.b16 %v48
    %v94 = vunpack.c.l.b16 %v49
    %v95 = vunpack.c.l.b16 %v50
    %v96 = vunpack.c.l.b16 %v51
    %v97 = vunpack.c.l.b16 %v52
    %v98 = vunpack.c.l.b16 %v53
    %v99 = vunpack.c.l.b16 %v54
    %v100 = vunpack.c.l.b16 %v55
    %v101 = vunpack.c.l.b16 %v56
    %v102 = vunpack.c.l.b16 %v57
    %v103 = vunpack.c.l.b16 %v58
    %v104 = vunpack.c.l.b16 %v59
    %v105 = vunpack.c.l.b16 %v60
    %v106 = vunpack.c.l.b16 %v61
    %v107 = vpack.c.b16 %v92, %v91
    %v108 = vpack.c.b16 %v94, %v93
    %v109 = vpack.c.b16 %v96, %v95
    %v110 = vpack.c.b16 %v98, %v97
    %v111 = vpack.c.b16 %v100, %v99
    %v112 = vpack.c.b16 %v102, %v101
    %v113 = vpack.c.b16 %v104, %v103
    %v114 = vpack.c.b16 %v106, %v105
    %123 = vmatprep.subr.bf16.mxu0 0
    %124 = vmatpush1.bf16.msra.mxu0 %v107
    %125 = vmatprep.subr.bf16.mxu0 0
    %126 = vmatpush1.bf16.msra.mxu0 %v108
    %127 = vmatprep.subr.bf16.mxu0 0
    %128 = vmatpush1.bf16.msra.mxu0 %v109
    %129 = vmatprep.subr.bf16.mxu0 0
    %130 = vmatpush1.bf16.msra.mxu0 %v110
    %131 = vmatprep.subr.bf16.mxu0 0
    %132 = vmatpush1.bf16.msra.mxu0 %v111
    %133 = vmatprep.subr.bf16.mxu0 0
    %134 = vmatpush1.bf16.msra.mxu0 %v112
    %135 = vmatprep.subr.bf16.mxu0 0
    %136 = vmatpush1.bf16.msra.mxu0 %v113
    %137 = vmatprep.subr.bf16.mxu0 0
    %138 = vmatpush1.bf16.msra.mxu0 %v114
    %139 = vmatprep.subr.bf16.mxu0 0
    %140 = vmatpush1.bf16.msra.mxu0 0
    %141 = vmatprep.subr.bf16.mxu0 0
    %142 = vmatpush1.bf16.msra.mxu0 0
    %143 = vmatprep.subr.bf16.mxu0 0
    %144 = vmatpush1.bf16.msra.mxu0 0
    %145 = vmatprep.subr.bf16.mxu0 0
    %146 = vmatpush1.bf16.msra.mxu0 0
    %147 = vmatprep.subr.bf16.mxu0 0
    %148 = vmatpush1.bf16.msra.mxu0 0
    %149 = vmatprep.subr.bf16.mxu0 0
    %150 = vmatpush1.bf16.msra.mxu0 0
    %151 = vmatprep.subr.bf16.mxu0 0
    %152 = vmatpush1.bf16.msra.mxu0 0
    %153 = vmatprep.subr.bf16.mxu0 0
    %154 = vmatpush1.bf16.msra.mxu0 0
    %155 = vmatprep.mubr.bf16.mxu0 0
    %156 = vmatmul.mubr.bf16.gmra.mrb[0].mxu0 %v73
    %v157 = vpop.f32.mrb[0].mxu0
    %v158 = vadd.f32 %v67, %v157
    %v159 = vpop.f32.mrb[0].mxu0
    %v160 = vpop.f32.mrb[0].mxu0
    %v161 = vadd.f32 %v67, %v160
    %v162 = vpop.f32.mrb[0].mxu0
    %163 = vdwg.mxu0
    %v164 = vmax.f32 %v158, 0.0
    %v165 = vmax.f32 %v161, 0.0
    %166 = vst [vmem:[#allocation7] sm:$0xff] %v164
    %167 = vst [vmem:[#allocation7 + $0x8] sm:$0xff] %v165
    // Predicated region
    $region22: #{tpu_custom_call.1} parent=1 // pred_check
      _
    $region23: #{tpu_custom_call.1} parent=1 // pred_check_branch
      %169 = sbr.rel (0) target = $region25
    $region24: #{tpu_custom_call.1} parent=1 // pred_region
      %s171 = ssub.s32 256, 256
      %172 = vsyncadd [#allocation4], %s171
      %s173 = sshll.u32 [#allocation7], 4
      %s174 = int_to_ptr.vmem [resolvable:$true] %s173
      %179 = dma.vmem_to_hbm [thread:$0]  %s174, 256, %s3, [#allocation4], 128, 128, 8
    $region25: #{tpu_custom_call.1} parent=1 // pred_fallthru
      _
    // Predicated region
    $region26: #{tpu_custom_call.1} parent=1 // pred_check
      _
    $region27: #{tpu_custom_call.1} parent=1 // pred_check_branch
      %181 = sbr.rel (0) target = $region29
    $region28: #{tpu_custom_call.1} parent=1 // pred_region
      %182 = dma.done [#allocation4], 256
    $region29: #{tpu_custom_call.1} parent=1 // pred_fallthru
      _
    %183 = vsyncpa [#allocation3], 1
    %184 = vsyncpa [#allocation6], 1
    %185 = vsyncpa [#allocation4], 1

</llo_original>
